<compile_context>
chip_gen: v7x
topology: tpu7x:2x2x1
jax: 0.10.0
libtpu: 0.0.40
codegen_flags: <defaults>
</compile_context>

<pallas_src>
import functools

import jax
import jax.numpy as jnp
from jax.experimental import pallas as pl
from jax.experimental.pallas import tpu as pltpu


def _round_up(x, m):
    return (x + m - 1) // m * m


def _choose_tile(v, max_tile):
    """Pick a lane-dense tile and padded extent for one vocab axis.

    Avoids the 128-wide fallback: prefers divisors of the 128-padded extent,
    then modest extra padding, so DMAs stay >= 512 lanes per row.
    """
    vp = _round_up(v, 128)
    if vp <= max_tile:
        return vp, vp
    if vp <= 2 * max_tile:                      # modest over-target tile, 0 waste
        return vp, vp
    for t in range(max_tile, 511, -128):        # largest divisor >= 512, 0 waste
        if vp % t == 0:
            return t, vp
    padded = _round_up(v, max_tile)             # <=10% padding: take max tiles
    if padded * 10 <= vp * 11:
        return max_tile, padded
    return 512, _round_up(v, 512)               # last resort: 512-wide tiles


# --------------------------------------------------------------------------
# Kernel 1: o2 = linear2(relu(linear1(x))), tiled over the vocab (K) dim.
# x / w1 / b1 are tiny and passed whole; w2 is streamed once as column tiles.
# h is recomputed per tile (a (1,CE)x(CE,128) matvec, negligible) so the
# single grid axis stays megacore-safe under "parallel".
# --------------------------------------------------------------------------
def _o2_kernel(x_ref, w1_ref, b1_ref, w2_ref, b2_ref, o2_ref):
    h = jnp.dot(x_ref[...], w1_ref[...], preferred_element_type=jnp.float32)
    h = jnp.maximum(h + b1_ref[...], 0.0)                       # ReLU, f32
    o2 = jnp.dot(h.astype(jnp.bfloat16), w2_ref[...],
                 preferred_element_type=jnp.float32) + b2_ref[...]
    o2_ref[...] = o2.astype(jnp.bfloat16)


# --------------------------------------------------------------------------
# Kernel 2: logits = o2 @ W3 + b3, streaming w3 (the HBM-bound part).
# Accumulates f32 directly into the resident (1, TN) output block.
# --------------------------------------------------------------------------
def _w3_kernel(o2_ref, w3_ref, b3_ref, logits_ref):
    k = pl.program_id(1)

    @pl.when(k == 0)
    def _():
        logits_ref[...] = b3_ref[...]

    logits_ref[...] += jnp.dot(o2_ref[...], w3_ref[...],
                               preferred_element_type=jnp.float32)


# --------------------------------------------------------------------------
# Kernel 3: masked log-softmax over the lane-padded (1, Vn) logits row.
# --------------------------------------------------------------------------
def _logsoftmax_kernel(logits_ref, logp_ref, *, valid_cols):
    o = logits_ref[...]                                         # (1, Vn) f32
    col = jax.lax.broadcasted_iota(jnp.int32, o.shape, 1)
    valid = col < valid_cols
    m = jnp.max(jnp.where(valid, o, -1e30), axis=-1, keepdims=True)
    s = o - m
    denom = jnp.sum(jnp.where(valid, jnp.exp(s), 0.0), axis=-1, keepdims=True)
    logp_ref[...] = s - jnp.log(denom)


# --------------------------------------------------------------------------
# Parameter prep: pad the vocab axes independently (K for w2-cols/b2/w3-rows,
# N for w3-cols/b3/logits) and cast the streamed (big) weights to bf16.
# --------------------------------------------------------------------------
def prepare_params(params, tn_target=2048, tk_target=512):
    emb = params["emb"].astype(jnp.float32)
    w1 = params["w1"].astype(jnp.float32)
    b1 = params["b1"].astype(jnp.float32)
    w2, b2, w3, b3 = params["w2"], params["b2"], params["w3"], params["b3"]

    V = int(w2.shape[1])
    TK, Vk = _choose_tile(V, tk_target)
    TN, Vn = _choose_tile(V, tn_target)

    w2_p = jnp.pad(w2, ((0, 0), (0, Vk - V))).astype(jnp.bfloat16)
    b2_p = jnp.pad(b2, ((0, 0), (0, Vk - V))).astype(jnp.float32)
    w3_p = jnp.pad(w3, ((0, Vk - V), (0, Vn - V))).astype(jnp.bfloat16)
    b3_p = jnp.pad(b3, ((0, 0), (0, Vn - V))).astype(jnp.float32)

    return dict(emb=emb, w1=w1, b1=b1, w2=w2_p, b2=b2_p, w3=w3_p, b3=b3_p,
                vocab_size=V, vocab_k_pad=Vk, vocab_n_pad=Vn,
                tile_k=TK, tile_n=TN)


def rubber_bard_forward(inputs, p):
    """inputs: int32 (context_size,) token ids.  Returns (log_probs, logits),
    each (1, vocab_size) -- same semantics as the PyTorch module."""
    V = p["vocab_size"]
    Vk, Vn = p["vocab_k_pad"], p["vocab_n_pad"]
    TK, TN = p["tile_k"], p["tile_n"]
    H = int(p["w1"].shape[1])                   # 128 (fixed by the module)

    ids = inputs.astype(jnp.int32)
    # Embedding gather of context_size rows + flatten to (1, C*E).
    # TODO(synk): gather of a handful of rows stays in XLA (no clean win in-kernel).
    x = p["emb"][ids].reshape(1, -1)

    # ---- Pass 1: o2 row, computed once, bf16 -------------------------------
    o2 = pl.pallas_call(
        _o2_kernel,
        grid=(Vk // TK,),
        in_specs=[
            pl.BlockSpec(x.shape, lambda j: (0, 0)),            # x  (whole, tiny)
            pl.BlockSpec(p["w1"].shape, lambda j: (0, 0)),      # w1 (whole, tiny)
            pl.BlockSpec(p["b1"].shape, lambda j: (0, 0)),      # b1 (whole, tiny)
            pl.BlockSpec((H, TK), lambda j: (0, j)),            # w2 column tile
            pl.BlockSpec((1, TK), lambda j: (0, j)),            # b2 tile
        ],
        out_specs=pl.BlockSpec((1, TK), lambda j: (0, j)),      # o2 tile (bf16)
        out_shape=jax.ShapeDtypeStruct((1, Vk), jnp.bfloat16),
        compiler_params=pltpu.CompilerParams(
            dimension_semantics=("parallel",)),
    )(x, p["w1"], p["b1"], p["w2"], p["b2"])

    # ---- Pass 2: logits = o2 @ W3 + b3 (HBM-bandwidth bound) ---------------
    n_tiles, k_tiles = Vn // TN, Vk // TK
    cost = pl.CostEstimate(flops=2 * Vk * Vn, transcendentals=0,
                           bytes_accessed=Vk * Vn * 2 + Vk * 2 + 2 * Vn * 4)
    logits_p = pl.pallas_call(
        _w3_kernel,
        grid=(n_tiles, k_tiles),                # N outer (parallel), K inner
        in_specs=[
            pl.BlockSpec((1, TK), lambda i, k: (0, k)),         # o2 K-tile
            pl.BlockSpec((TK, TN), lambda i, k: (k, i)),        # w3 (K, N) tile
            pl.BlockSpec((1, TN), lambda i, k: (0, i)),         # b3 N-tile
        ],
        out_specs=pl.BlockSpec((1, TN), lambda i, k: (0, i)),   # logits N-tile
        out_shape=jax.ShapeDtypeStruct((1, Vn), jnp.float32),
        compiler_params=pltpu.CompilerParams(
            dimension_semantics=("parallel", "arbitrary"),
            # v7x-safe cap (64 MiB physical); actual use is a few MiB.
            vmem_limit_bytes=48 * 1024 * 1024),
        cost_estimate=cost,
    )(o2, p["w3"], p["b3"])

    # ---- Pass 3: masked log-softmax over the padded logits row -------------
    vmem = pl.BlockSpec(memory_space=pltpu.MemorySpace.VMEM)
    logp_p = pl.pallas_call(
        functools.partial(_logsoftmax_kernel, valid_cols=V),
        out_shape=jax.ShapeDtypeStruct((1, Vn), jnp.float32),
        in_specs=[vmem],
        out_specs=vmem,
    )(logits_p)

    # Strip lane padding (batch stays 1 per the module's .view((1, -1))).
    return logp_p[:, :V], logits_p[:, :V]


def init_params(key, vocab_size, embedding_dim, context_size):
    k = jax.random.split(key, 7)
    in1 = context_size * embedding_dim
    return {
        "emb": jax.random.normal(k[0], (vocab_size, embedding_dim), jnp.float32),
        # weights stored transposed relative to nn.Linear: (in, out)
        "w1": jax.random.normal(k[1], (in1, 128), jnp.float32) * 0.1,
        "b1": jax.random.normal(k[2], (1, 128), jnp.float32) * 0.1,
        "w2": jax.random.normal(k[3], (128, vocab_size), jnp.float32) * 0.1,
        "b2": jax.random.normal(k[4], (1, vocab_size), jnp.float32) * 0.1,
        "w3": jax.random.normal(k[5], (vocab_size, vocab_size), jnp.float32) * 0.1,
        "b3": jax.random.normal(k[6], (1, vocab_size), jnp.float32) * 0.1,
    }


if __name__ == "__main__":
    vocab_size, embedding_dim, context_size = 32, 8, 4

    key = jax.random.PRNGKey(0)
    pkey, ikey = jax.random.split(key)
    params = init_params(pkey, vocab_size, embedding_dim, context_size)
    inputs = jax.random.randint(ikey, (context_size,), 0, vocab_size, jnp.int32)

    prepared = prepare_params(params)
    log_probs, logits = rubber_bard_forward(inputs, prepared)
    jax.block_until_ready((log_probs, logits))

    # Reference in plain JAX, using the same bf16 weight streaming as the kernel.
    x = params["emb"][inputs].reshape((1, -1))
    h = jnp.maximum(x @ params["w1"] + params["b1"], 0.0)
    o2 = jnp.dot(h.astype(jnp.bfloat16), params["w2"].astype(jnp.bfloat16),
                 preferred_element_type=jnp.float32) + params["b2"]
    o3 = jnp.dot(o2.astype(jnp.bfloat16), params["w3"].astype(jnp.bfloat16),
                 preferred_element_type=jnp.float32) + params["b3"]
    ref_lp = jax.nn.log_softmax(o3, axis=1)

    assert log_probs.shape == (1, vocab_size) and logits.shape == (1, vocab_size)
    assert jnp.allclose(logits, o3, atol=2e-2, rtol=2e-2), \
        float(jnp.max(jnp.abs(logits - o3)))
    assert jnp.allclose(log_probs, ref_lp, atol=2e-2, rtol=2e-2), \
        float(jnp.max(jnp.abs(log_probs - ref_lp)))

    print("KERNEL_OK")
</pallas_src>

<mosaic_0001>
module attributes {stable_mosaic.version = 11 : i64} {
  func.func @_o2_kernel(%arg0: i32, %arg1: memref<1x32xf32, #tpu.memory_space<vmem>>, %arg2: memref<32x128xf32, #tpu.memory_space<vmem>>, %arg3: memref<1x128xf32, #tpu.memory_space<vmem>>, %arg4: memref<128x128xbf16, #tpu.memory_space<vmem>>, %arg5: memref<1x128xf32, #tpu.memory_space<vmem>>, %arg6: memref<1x128xbf16, #tpu.memory_space<vmem>>) attributes {dimension_semantics = [#tpu.dimension_semantics<parallel>], iteration_bounds = array<i64: 1>, scalar_prefetch = 0 : i64, scratch_operands = 0 : i64, tpu.core_type = #tpu.core_type<tc>, window_params = [{pipeline_mode = #tpu.pipeline_mode<synchronous>, transform_indices = @transform_0, window_bounds = array<i64: 1, 32>}, {pipeline_mode = #tpu.pipeline_mode<synchronous>, transform_indices = @transform_1, window_bounds = array<i64: 32, 128>}, {pipeline_mode = #tpu.pipeline_mode<synchronous>, transform_indices = @transform_2, window_bounds = array<i64: 1, 128>}, {transform_indices = @transform_3, window_bounds = array<i64: 128, 128>}, {transform_indices = @transform_4, window_bounds = array<i64: 1, 128>}, {transform_indices = @transform_5, window_bounds = array<i64: 1, 128>}]} {
    %c0 = arith.constant 0 : index
    %c0_0 = arith.constant 0 : index
    %0 = vector.load %arg1[%c0, %c0_0] : memref<1x32xf32, #tpu.memory_space<vmem>>, vector<1x32xf32>
    %c0_1 = arith.constant 0 : index
    %c0_2 = arith.constant 0 : index
    %1 = vector.load %arg2[%c0_1, %c0_2] : memref<32x128xf32, #tpu.memory_space<vmem>>, vector<32x128xf32>
    %cst = arith.constant dense<0.000000e+00> : vector<1x128xf32>
    %2 = tpu.matmul %0, %1, %cst {dimension_numbers = #tpu.dot_dimension_numbers<[1], [0], [0], [1], [0, 0, 1, 1], [], []>} : vector<1x32xf32>, vector<32x128xf32>, vector<1x128xf32> -> vector<1x128xf32>
    %c0_3 = arith.constant 0 : index
    %c0_4 = arith.constant 0 : index
    %3 = vector.load %arg3[%c0_3, %c0_4] : memref<1x128xf32, #tpu.memory_space<vmem>>, vector<1x128xf32>
    %4 = arith.addf %2, %3 : vector<1x128xf32>
    %cst_5 = arith.constant 0.000000e+00 : f32
    %5 = vector.broadcast %cst_5 : f32 to vector<1x128xf32>
    %6 = arith.maximumf %4, %5 : vector<1x128xf32>
    %7 = arith.truncf %6 : vector<1x128xf32> to vector<1x128xbf16>
    %c0_6 = arith.constant 0 : index
    %c0_7 = arith.constant 0 : index
    %8 = vector.load %arg4[%c0_6, %c0_7] : memref<128x128xbf16, #tpu.memory_space<vmem>>, vector<128x128xbf16>
    %cst_8 = arith.constant dense<0.000000e+00> : vector<1x128xf32>
    %9 = tpu.matmul %7, %8, %cst_8 {dimension_numbers = #tpu.dot_dimension_numbers<[1], [0], [0], [1], [0, 0, 1, 1], [], []>} : vector<1x128xbf16>, vector<128x128xbf16>, vector<1x128xf32> -> vector<1x128xf32>
    %c0_9 = arith.constant 0 : index
    %c0_10 = arith.constant 0 : index
    %10 = vector.load %arg5[%c0_9, %c0_10] : memref<1x128xf32, #tpu.memory_space<vmem>>, vector<1x128xf32>
    %11 = arith.addf %9, %10 : vector<1x128xf32>
    %12 = arith.truncf %11 : vector<1x128xf32> to vector<1x128xbf16>
    %c0_11 = arith.constant 0 : index
    %c0_12 = arith.constant 0 : index
    %13 = vector.load %arg6[%c0_11, %c0_12] : memref<1x128xbf16, #tpu.memory_space<vmem>>, vector<1x128xbf16>
    tpu.vector_store %arg6[%c0_11, %c0_12], %12 {strides = array<i32>} : memref<1x128xbf16, #tpu.memory_space<vmem>>, vector<1x128xbf16>,
    return
  }
  func.func @transform_0(%arg0: i32) -> (i32, i32) {
    %c0_i32 = arith.constant 0 : i32
    %c0_i32_0 = arith.constant 0 : i32
    %c0_i32_1 = arith.constant 0 : i32
    return %c0_i32, %c0_i32_0 : i32, i32
  }
  func.func @transform_1(%arg0: i32) -> (i32, i32) {
    %c0_i32 = arith.constant 0 : i32
    %c0_i32_0 = arith.constant 0 : i32
    %c0_i32_1 = arith.constant 0 : i32
    return %c0_i32, %c0_i32_0 : i32, i32
  }
  func.func @transform_2(%arg0: i32) -> (i32, i32) {
    %c0_i32 = arith.constant 0 : i32
    %c0_i32_0 = arith.constant 0 : i32
    %c0_i32_1 = arith.constant 0 : i32
    return %c0_i32, %c0_i32_0 : i32, i32
  }
  func.func @transform_3(%arg0: i32) -> (i32, i32) {
    %c0_i32 = arith.constant 0 : i32
    %c0_i32_0 = arith.constant 0 : i32
    return %c0_i32, %arg0 : i32, i32
  }
  func.func @transform_4(%arg0: i32) -> (i32, i32) {
    %c0_i32 = arith.constant 0 : i32
    %c0_i32_0 = arith.constant 0 : i32
    return %c0_i32, %arg0 : i32, i32
  }
  func.func @transform_5(%arg0: i32) -> (i32, i32) {
    %c0_i32 = arith.constant 0 : i32
    %c0_i32_0 = arith.constant 0 : i32
    return %c0_i32, %arg0 : i32, i32
  }
}

</mosaic_0001>

<llo_original>
// kernel: tpu_custom_call.1
$region0: #{tpu_custom_call.1}
  #allocation0 [shape = 'u32[]', space=smem, size = 0x4, offset = 0x4, fixed_abs, tag = 'smem constant byte address 0x4 - core index']
  #allocation1 [shape = 'u32[144,128]{1,0:T(1,128)}', space=vmem, size = 0x12000, scoped, tag = 'internal scratch']
  %s0 = inlined_call_operand.hbm [shape: f32[1,32], index: 0, kind: input, shape index: {}]
  %s1 = inlined_call_operand.hbm [shape: f32[32,128], index: 1, kind: input, shape index: {}]
  %s2 = inlined_call_operand.vmem [shape: f32[1,128], index: 2, kind: input, shape index: {}]
  %s3 = inlined_call_operand.hbm [shape: bf16[128,128], index: 3, kind: input, shape index: {}]
  %s4 = inlined_call_operand.vmem [shape: f32[1,128], index: 4, kind: input, shape index: {}]
  %s5 = inlined_call_operand.hbm [shape: bf16[1,128], index: 5, kind: output, shape index: {}]
  %s6 = sld [smem:[#allocation0]]
  $region42: #{tpu_custom_call.1} parent=0
    _
  %s8 = ssub.s32 1, %s6
  %s9 = scalar_select 0, %s8, %s6
  $region1: #{tpu_custom_call.1} parent=0
    #allocation2 [shape = 'u8[512]{0}', space=vmem, size = 0x400, scoped, tag = 'input window, operand 0, single buffered']
    #allocation3 [shape = 's32[1]{0}', space=sflag, size = 0x4, scoped, tag = 'scoped memory for tpu_custom_call.1']
    #allocation4 [shape = 's32[1]{0}', space=sflag, size = 0x4, scoped, tag = 'scoped memory for tpu_custom_call.1']
    #allocation5 [shape = 'u8[16384]{0}', space=vmem, size = 0x4000, scoped, tag = 'input window, operand 1, single buffered']
    #allocation6 [shape = 's32[1]{0}', space=sflag, size = 0x4, scoped, tag = 'scoped memory for tpu_custom_call.1']
    #allocation7 [shape = 'u8[32768]{0}', space=vmem, size = 0x8000, scoped, tag = 'input window, operand 3, single buffered']
    #allocation8 [shape = 'u8[512]{0}', space=vmem, size = 0x400, scoped, tag = 'output window, operand 0, single buffered']
    %10 = vsyncpa [#allocation3], 0
    %11 = vsyncpa [#allocation6], 0
    %12 = vsyncpa [#allocation4], 0
    // Predicated region
    $region2: #{tpu_custom_call.1} parent=1 // pred_check
      _
    $region3: #{tpu_custom_call.1} parent=1 // pred_check_branch
      %14 = sbr.rel (0) target = $region5
    $region4: #{tpu_custom_call.1} parent=1 // pred_region
      %s16 = ssub.s32 16, 16
      %17 = vsyncadd [#allocation3], %s16
      %s19 = sshll.u32 [#allocation2], 4
      %s20 = int_to_ptr.vmem [resolvable:$true] %s19
      %22 = dma.hbm_to_vmem [thread:$0]  %s0, 16, %s20, [#allocation3]
    $region5: #{tpu_custom_call.1} parent=1 // pred_fallthru
      _
    // Predicated region
    $region6: #{tpu_custom_call.1} parent=1 // pred_check
      _
    $region7: #{tpu_custom_call.1} parent=1 // pred_check_branch
      %24 = sbr.rel (0) target = $region9
    $region8: #{tpu_custom_call.1} parent=1 // pred_region
      %s26 = ssub.s32 512, 512
      %27 = vsyncadd [#allocation6], %s26
      %s28 = sshll.u32 [#allocation5], 4
      %s29 = int_to_ptr.vmem [resolvable:$true] %s28
      %34 = dma.hbm_to_vmem [thread:$0]  %s1, 512, %s29, [#allocation6], 128, 128, 8
    $region9: #{tpu_custom_call.1} parent=1 // pred_fallthru
      _
    // Predicated region
    $region10: #{tpu_custom_call.1} parent=1 // pred_check
      _
    $region11: #{tpu_custom_call.1} parent=1 // pred_check_branch
      %36 = sbr.rel (0) target = $region13
    $region12: #{tpu_custom_call.1} parent=1 // pred_region
      _
    $region13: #{tpu_custom_call.1} parent=1 // pred_fallthru
      _
    // Predicated region
    $region14: #{tpu_custom_call.1} parent=1 // pred_check
      _
    $region15: #{tpu_custom_call.1} parent=1 // pred_check_branch
      %38 = sbr.rel (0) target = $region17
    $region16: #{tpu_custom_call.1} parent=1 // pred_region
      %s40 = ssub.s32 1024, 1024
      %41 = vsyncadd [#allocation6], %s40
      %s42 = sshll.u32 [#allocation7], 4
      %s43 = int_to_ptr.vmem [resolvable:$true] %s42
      %48 = dma.hbm_to_vmem [thread:$0]  %s3, 1024, %s43, [#allocation6], 64, 64, 4
    $region17: #{tpu_custom_call.1} parent=1 // pred_fallthru
      _
    // Predicated region
    $region18: #{tpu_custom_call.1} parent=1 // pred_check
      _
    $region19: #{tpu_custom_call.1} parent=1 // pred_check_branch
      %50 = sbr.rel (0) target = $region21
    $region20: #{tpu_custom_call.1} parent=1 // pred_region
      _
    $region21: #{tpu_custom_call.1} parent=1 // pred_fallthru
      _
    // Predicated region
    $region22: #{tpu_custom_call.1} parent=1 // pred_check
      _
    $region23: #{tpu_custom_call.1} parent=1 // pred_check_branch
      %52 = sbr.rel (0) target = $region25
    $region24: #{tpu_custom_call.1} parent=1 // pred_region
      %53 = dma.done [#allocation3], 16
    $region25: #{tpu_custom_call.1} parent=1 // pred_fallthru
      _
    // Predicated region
    $region26: #{tpu_custom_call.1} parent=1 // pred_check
      _
    $region27: #{tpu_custom_call.1} parent=1 // pred_check_branch
      %55 = sbr.rel (0) target = $region29
    $region28: #{tpu_custom_call.1} parent=1 // pred_region
      %56 = dma.done [#allocation6], 512
    $region29: #{tpu_custom_call.1} parent=1 // pred_fallthru
      _
    // Predicated region
    $region30: #{tpu_custom_call.1} parent=1 // pred_check
      _
    $region31: #{tpu_custom_call.1} parent=1 // pred_check_branch
      %58 = sbr.rel (0) target = $region33
    $region32: #{tpu_custom_call.1} parent=1 // pred_region
      %59 = dma.done [#allocation6], 1024
    $region33: #{tpu_custom_call.1} parent=1 // pred_fallthru
      _
    %v61 = vld [vmem:[#allocation2] sm:$0x1]
    %v62 = vld [vmem:[#allocation5] sm:$0xff]
    %v63 = vld [vmem:[#allocation5 + $0x8] sm:$0xff]
    %v64 = vld [vmem:[#allocation5 + $0x10] sm:$0xff]
    %v65 = vld [vmem:[#allocation5 + $0x18] sm:$0xff]
    %v66 = vld [vmem:[%s2] sm:$0x1]
    %vm67 = vcmask 261120
    %v69 = vsel %vm67, %v61, 0
    %71 = vmatprep.subr.mxu0 0.0
    %72 = vmatpush1.msra.mxu0 %v62
    %73 = vmatprep.subr.mxu0 0.0
    %74 = vmatpush1.msra.mxu0 %v63
    %75 = vmatprep.subr.mxu0 0.0
    %76 = vmatpush1.msra.mxu0 %v64
    %77 = vmatprep.subr.mxu0 0.0
    %78 = vmatpush1.msra.mxu0 %v65
    %79 = vmatprep.subr.mxu0 0.0
    %80 = vmatpush1.msra.mxu0 0.0
    %81 = vmatprep.subr.mxu0 0.0
    %82 = vmatpush1.msra.mxu0 0.0
    %83 = vmatprep.subr.mxu0 0.0
    %84 = vmatpush1.msra.mxu0 0.0
    %85 = vmatprep.subr.mxu0 0.0
    %86 = vmatpush1.msra.mxu0 0.0
    %87 = vmatprep.subr.mxu0 0.0
    %88 = vmatpush1.msra.mxu0 0.0
    %89 = vmatprep.subr.mxu0 0.0
    %90 = vmatpush1.msra.mxu0 0.0
    %91 = vmatprep.subr.mxu0 0.0
    %92 = vmatpush1.msra.mxu0 0.0
    %93 = vmatprep.subr.mxu0 0.0
    %94 = vmatpush1.msra.mxu0 0.0
    %95 = vmatprep.subr.mxu0 0.0
    %96 = vmatpush1.msra.mxu0 0.0
    %97 = vmatprep.subr.mxu0 0.0
    %98 = vmatpush1.msra.mxu0 0.0
    %99 = vmatprep.subr.mxu0 0.0
    %100 = vmatpush1.msra.mxu0 0.0
    %101 = vmatprep.subr.mxu0 0.0
    %102 = vmatpush1.msra.mxu0 0.0
    %103 = vmatprep.subr.mxu0 0.0
    %104 = vmatpush1.msra.mxu0 0.0
    %105 = vmatprep.subr.mxu0 0.0
    %106 = vmatpush1.msra.mxu0 0.0
    %107 = vmatprep.subr.mxu0 0.0
    %108 = vmatpush1.msra.mxu0 0.0
    %109 = vmatprep.subr.mxu0 0.0
    %110 = vmatpush1.msra.mxu0 0.0
    %111 = vmatprep.subr.mxu0 0.0
    %112 = vmatpush1.msra.mxu0 0.0
    %113 = vmatprep.subr.mxu0 0.0
    %114 = vmatpush1.msra.mxu0 0.0
    %115 = vmatprep.subr.mxu0 0.0
    %116 = vmatpush1.msra.mxu0 0.0
    %117 = vmatprep.subr.mxu0 0.0
    %118 = vmatpush1.msra.mxu0 0.0
    %119 = vmatprep.subr.mxu0 0.0
    %120 = vmatpush1.msra.mxu0 0.0
    %121 = vmatprep.subr.mxu0 0.0
    %122 = vmatpush1.msra.mxu0 0.0
    %123 = vmatprep.subr.mxu0 0.0
    %124 = vmatpush1.msra.mxu0 0.0
    %125 = vmatprep.subr.mxu0 0.0
    %126 = vmatpush1.msra.mxu0 0.0
    %127 = vmatprep.subr.mxu0 0.0
    %128 = vmatpush1.msra.mxu0 0.0
    %129 = vmatprep.subr.mxu0 0.0
    %130 = vmatpush1.msra.mxu0 0.0
    %131 = vmatprep.subr.mxu0 0.0
    %132 = vmatpush1.msra.mxu0 0.0
    %133 = vmatprep.subr.mxu0 0.0
    %134 = vmatpush1.msra.mxu0 0.0
    %135 = vmatprep.mubr.f32.mxu0 0.0
    %136 = vmatmul.mubr.f32.gmra.mrb[0].mxu0 %v69
    %v137 = vpop.f32.mrb[0].mxu0
    %v138 = vadd.f32 %v66, %v137
    %v139 = vpop.f32.mrb[0].mxu0
    %140 = vdwg.mxu0
    %v141 = vmax.f32 %v138, 0.0
    %v142 = vpack.c.bf16 %v141, %v141
    %v143 = vld [vmem:[#allocation7] sm:$0xf]
    %v144 = vld [vmem:[#allocation7 + $0x4] sm:$0xf]
    %v145 = vld [vmem:[#allocation7 + $0x8] sm:$0xf]
    %v146 = vld [vmem:[#allocation7 + $0xc] sm:$0xf]
    %v147 = vld [vmem:[#allocation7 + $0x10] sm:$0xf]
    %v148 = vld [vmem:[#allocation7 + $0x14] sm:$0xf]
    %v149 = vld [vmem:[#allocation7 + $0x18] sm:$0xf]
    %v150 = vld [vmem:[#allocation7 + $0x1c] sm:$0xf]
    %v151 = vld [vmem:[#allocation7 + $0x20] sm:$0xf]
    %v152 = vld [vmem:[#allocation7 + $0x24] sm:$0xf]
    %v153 = vld [vmem:[#allocation7 + $0x28] sm:$0xf]
    %v154 = vld [vmem:[#allocation7 + $0x2c] sm:$0xf]
    %v155 = vld [vmem:[#allocation7 + $0x30] sm:$0xf]
    %v156 = vld [vmem:[#allocation7 + $0x34] sm:$0xf]
    %v157 = vld [vmem:[#allocation7 + $0x38] sm:$0xf]
    %v158 = vld [vmem:[#allocation7 + $0x3c] sm:$0xf]
    %v159 = vld [vmem:[%s4] sm:$0x1]
    %v176 = vunpack.c.l.b16 %v143
    %v177 = vunpack.c.l.b16 %v144
    %v178 = vunpack.c.l.b16 %v145
    %v179 = vunpack.c.l.b16 %v146
    %v180 = vunpack.c.l.b16 %v147
    %v181 = vunpack.c.l.b16 %v148
    %v182 = vunpack.c.l.b16 %v149
    %v183 = vunpack.c.l.b16 %v150
    %v184 = vunpack.c.l.b16 %v151
    %v185 = vunpack.c.l.b16 %v152
    %v186 = vunpack.c.l.b16 %v153
    %v187 = vunpack.c.l.b16 %v154
    %v188 = vunpack.c.l.b16 %v155
    %v189 = vunpack.c.l.b16 %v156
    %v190 = vunpack.c.l.b16 %v157
    %v191 = vunpack.c.l.b16 %v158
    %v192 = vpack.c.b16 %v177, %v176
    %v193 = vpack.c.b16 %v179, %v178
    %v194 = vpack.c.b16 %v181, %v180
    %v195 = vpack.c.b16 %v183, %v182
    %v196 = vpack.c.b16 %v185, %v184
    %v197 = vpack.c.b16 %v187, %v186
    %v198 = vpack.c.b16 %v189, %v188
    %v199 = vpack.c.b16 %v191, %v190
    %208 = vmatprep.subr.bf16.mxu0 0
    %209 = vmatpush1.bf16.msra.mxu0 %v192
    %210 = vmatprep.subr.bf16.mxu0 0
    %211 = vmatpush1.bf16.msra.mxu0 %v193
    %212 = vmatprep.subr.bf16.mxu0 0
    %213 = vmatpush1.bf16.msra.mxu0 %v194
    %214 = vmatprep.subr.bf16.mxu0 0
    %215 = vmatpush1.bf16.msra.mxu0 %v195
    %216 = vmatprep.subr.bf16.mxu0 0
    %217 = vmatpush1.bf16.msra.mxu0 %v196
    %218 = vmatprep.subr.bf16.mxu0 0
    %219 = vmatpush1.bf16.msra.mxu0 %v197
    %220 = vmatprep.subr.bf16.mxu0 0
    %221 = vmatpush1.bf16.msra.mxu0 %v198
    %222 = vmatprep.subr.bf16.mxu0 0
    %223 = vmatpush1.bf16.msra.mxu0 %v199
    %224 = vmatprep.subr.bf16.mxu0 0
    %225 = vmatpush1.bf16.msra.mxu0 0
    %226 = vmatprep.subr.bf16.mxu0 0
    %227 = vmatpush1.bf16.msra.mxu0 0
    %228 = vmatprep.subr.bf16.mxu0 0
    %229 = vmatpush1.bf16.msra.mxu0 0
    %230 = vmatprep.subr.bf16.mxu0 0
    %231 = vmatpush1.bf16.msra.mxu0 0
    %232 = vmatprep.subr.bf16.mxu0 0
    %233 = vmatpush1.bf16.msra.mxu0 0
    %234 = vmatprep.subr.bf16.mxu0 0
    %235 = vmatpush1.bf16.msra.mxu0 0
    %236 = vmatprep.subr.bf16.mxu0 0
    %237 = vmatpush1.bf16.msra.mxu0 0
    %238 = vmatprep.subr.bf16.mxu0 0
    %239 = vmatpush1.bf16.msra.mxu0 0
    %240 = vmatprep.mubr.bf16.mxu0 0
    %241 = vmatmul.mubr.bf16.gmra.mrb[0].mxu0 %v142
    %v242 = vpop.f32.mrb[0].mxu0
    %v243 = vadd.f32 %v159, %v242
    %v244 = vpop.f32.mrb[0].mxu0
    %v245 = vpop.f32.mrb[0].mxu0
    %v246 = vpop.f32.mrb[0].mxu0
    %247 = vdwg.mxu0
    %v248 = vpack.c.bf16 %v243, %v243
    %vm249 = vcmask 1040384
    %vm250 = vsmask.f32 256
    %vm251 = vmand %vm249, %vm250
    %v252 = vld [vmem:[#allocation8] sm:$0x1]
    %v253 = vsel %vm251, %v248, %v252
    %254 = vst [vmem:[#allocation8] sm:$0x1] %v253
    // Predicated region
    $region34: #{tpu_custom_call.1} parent=1 // pred_check
      _
    $region35: #{tpu_custom_call.1} parent=1 // pred_check_branch
      %256 = sbr.rel (0) target = $region37
    $region36: #{tpu_custom_call.1} parent=1 // pred_region
      %s258 = ssub.s32 16, 16
      %259 = vsyncadd [#allocation4], %s258
      %s261 = sshll.u32 [#allocation8], 4
      %s262 = int_to_ptr.vmem [resolvable:$true] %s261
      %264 = dma.vmem_to_hbm [thread:$0]  %s262, 16, %s5, [#allocation4]
    $region37: #{tpu_custom_call.1} parent=1 // pred_fallthru
      _
    // Predicated region
    $region38: #{tpu_custom_call.1} parent=1 // pred_check
      _
    $region39: #{tpu_custom_call.1} parent=1 // pred_check_branch
      %266 = sbr.rel (0) target = $region41
    $region40: #{tpu_custom_call.1} parent=1 // pred_region
      %267 = dma.done [#allocation4], 16
    $region41: #{tpu_custom_call.1} parent=1 // pred_fallthru
      _
    %268 = vsyncpa [#allocation3], 1
    %269 = vsyncpa [#allocation6], 1
    %270 = vsyncpa [#allocation4], 1

</llo_original>
